<compile_context>
chip_gen: v6e
topology: v6e:2x2x1
jax: 0.10.0
libtpu: 0.0.40
codegen_flags: <defaults>
</compile_context>

<pallas_src>
import math

import jax
import jax.numpy as jnp
from jax.experimental import pallas as pl
from jax.experimental.pallas import tpu as pltpu

_IN = 28 * 28        # 784
_HID = 100
_OUT = 10
_HID_PAD = 128       # lane-dense hidden
_OUT_PAD = 128       # lane-dense output


def _cdiv(a, b):
    return (a + b - 1) // b


def _round_up(a, b):
    return _cdiv(a, b) * b


def _tpu_budget():
    """Generation-aware (tb_max, vmem_limit_bytes).

    v5e/v6e: 128 MiB VMEM per TensorCore -> big batch tiles amortize the ~0.35us
    per-step grid overhead. v7x: 64 MiB -> cap the tile and scoped-VMEM limit lower.
    """
    try:
        vmem = int(pltpu.get_tpu_info().vmem_capacity_bytes)
    except Exception:                 # no device / unknown chip: conservative default
        vmem = 64 << 20
    if vmem >= (128 << 20):           # v5e / v6e
        return 8192, 100 << 20
    return 4096, 48 << 20             # v7x (64 MiB VMEM per TC)


_TB_MAX, _VMEM_LIMIT = _tpu_budget()


def _mlp_kernel(x_ref, w1_ref, b1_ref, w2_ref, b2_ref, o_ref):
    # x arrives as f32 straight from HBM; the bf16 cast happens on-chip so there is
    # no separate wrapper-side cast pass over x.
    x = x_ref[...].astype(jnp.bfloat16)
    # fc1: (TB, 784)bf16 @ (784, 128)bf16 -> f32 acc; bias + ReLU in f32 (works on
    # v5e's f32-only VPU, hits the bf16 MXU path everywhere).
    h = jnp.dot(x, w1_ref[...], preferred_element_type=jnp.float32)
    h = jnp.maximum(h + b1_ref[...], 0.0)
    # fc2: single bf16 cast of the activation before the second MXU pass.
    y = jnp.dot(h.astype(jnp.bfloat16), w2_ref[...],
                preferred_element_type=jnp.float32)
    o_ref[...] = (y + b2_ref[...]).astype(o_ref.dtype)   # bf16 store: half the out stream


def pad_params(w1, b1, w2, b2):
    """One-time weight/bias padding + bf16 casts (hoisted out of the per-call path).

    Zero-padded hidden (100->128) and output (10->128) columns provably stay zero:
    relu(x@0 + 0) = 0, and zero w2 rows/cols plus zero b2 padding contribute nothing.
    """
    w1_p = jnp.zeros((_IN, _HID_PAD), jnp.bfloat16).at[:, :_HID].set(
        w1.astype(jnp.bfloat16))
    b1_p = jnp.zeros((1, _HID_PAD), jnp.float32).at[:, :_HID].set(b1)
    w2_p = jnp.zeros((_HID_PAD, _OUT_PAD), jnp.bfloat16).at[:_HID, :_OUT].set(
        w2.astype(jnp.bfloat16))
    b2_p = jnp.zeros((1, _OUT_PAD), jnp.float32).at[:, :_OUT].set(b2)
    return w1_p, b1_p, w2_p, b2_p


@jax.jit
def babys_first_net(x_nchw, w1_p, b1_p, w2_p, b2_p):
    """Forward pass: relu(x @ W1 + b1) @ W2 + b2. Returns (B, 10) float32 logits.

    x_nchw: (B, 1, 28, 28) float32; params are the outputs of pad_params().
    """
    B = x_nchw.shape[0]
    x = x_nchw.reshape(B, _IN)            # torch's x.view(-1, 784); stays f32

    # Batch tiling: multiple of 8 (sublane). If a single tile would cover the whole
    # batch, split into >=2 tiles so ("parallel",) shards the batch across v7x's two
    # TensorCores (harmless on single-TC v5e/v6e).
    b8 = _round_up(max(B, 8), 8)
    tb = min(_TB_MAX, b8)
    if 8 < b8 <= _TB_MAX:
        tb = _round_up(_cdiv(b8, 2), 8)
    b_pad = _cdiv(b8, tb) * tb
    if b_pad != B:
        x = jnp.pad(x, ((0, b_pad - B), (0, 0)))
    grid = (b_pad // tb,)

    out = pl.pallas_call(
        _mlp_kernel,
        out_shape=jax.ShapeDtypeStruct((b_pad, _OUT_PAD), jnp.bfloat16),
        grid=grid,
        in_specs=[
            pl.BlockSpec((tb, _IN), lambda i: (i, 0)),             # x: tiled over batch
            pl.BlockSpec((_IN, _HID_PAD), lambda i: (0, 0)),       # w1: VMEM-resident
            pl.BlockSpec((1, _HID_PAD), lambda i: (0, 0)),         # b1
            pl.BlockSpec((_HID_PAD, _OUT_PAD), lambda i: (0, 0)),  # w2
            pl.BlockSpec((1, _OUT_PAD), lambda i: (0, 0)),         # b2
        ],
        out_specs=pl.BlockSpec((tb, _OUT_PAD), lambda i: (i, 0)),
        compiler_params=pltpu.CompilerParams(
            dimension_semantics=("parallel",),
            vmem_limit_bytes=_VMEM_LIMIT,
        ),
    )(x, w1_p, b1_p, w2_p, b2_p)

    # Slice + upcast stay inside this jit so XLA fuses them (no extra full HBM pass
    # over the padded buffer outside the jit).
    return out[:B, :_OUT].astype(jnp.float32)


def init_params(key):
    """Deterministic init mirroring nn.Linear's default (uniform +/- 1/sqrt(fan_in))."""
    k1, k2, k3, k4 = jax.random.split(key, 4)
    bound1 = 1.0 / math.sqrt(float(_IN))
    bound2 = 1.0 / math.sqrt(float(_HID))
    w1 = jax.random.uniform(k1, (_IN, _HID), jnp.float32, -bound1, bound1)
    b1 = jax.random.uniform(k2, (_HID,), jnp.float32, -bound1, bound1)
    w2 = jax.random.uniform(k3, (_HID, _OUT), jnp.float32, -bound2, bound2)
    b2 = jax.random.uniform(k4, (_OUT,), jnp.float32, -bound2, bound2)
    return w1, b1, w2, b2


def _reference_f32(x_nchw, w1, b1, w2, b2):
    xf = x_nchw.reshape(x_nchw.shape[0], -1)
    return jnp.maximum(xf @ w1 + b1, 0.0) @ w2 + b2


if __name__ == "__main__":
    key = jax.random.PRNGKey(0)
    kx, kp = jax.random.split(key)

    w1, b1, w2, b2 = init_params(kp)
    params_p = jax.block_until_ready(pad_params(w1, b1, w2, b2))   # pad/cast once

    # Small MNIST-like batch: (B, C, H, W) = (2, 1, 28, 28)
    x = jax.random.normal(kx, (2, 1, 28, 28), jnp.float32)
    logits = jax.block_until_ready(babys_first_net(x, *params_p))
    assert logits.shape == (2, 10)

    # Reference with matching bf16-operand / f32-accumulate / bf16-output math.
    xb = x.reshape(2, -1).astype(jnp.bfloat16)
    h_ref = jnp.maximum(
        jnp.dot(xb, w1.astype(jnp.bfloat16), preferred_element_type=jnp.float32) + b1,
        0.0)
    ref_bf = (jnp.dot(h_ref.astype(jnp.bfloat16), w2.astype(jnp.bfloat16),
                      preferred_element_type=jnp.float32) + b2).astype(jnp.bfloat16)
    assert jnp.allclose(logits, ref_bf.astype(jnp.float32), atol=2e-2, rtol=2e-2)

    # Loose sanity check vs. full-f32 PyTorch-equivalent math.
    assert jnp.allclose(logits, _reference_f32(x, w1, b1, w2, b2),
                        atol=5e-2, rtol=5e-2)

    # Exercise the multi-tile (2-TensorCore) + ragged-batch padding path too.
    x2 = jax.random.normal(kx, (100, 1, 28, 28), jnp.float32)
    logits2 = jax.block_until_ready(babys_first_net(x2, *params_p))
    assert logits2.shape == (100, 10)
    assert jnp.allclose(logits2, _reference_f32(x2, w1, b1, w2, b2),
                        atol=5e-2, rtol=5e-2)

    print("KERNEL_OK")
</pallas_src>

<mosaic_0001>
module attributes {stable_mosaic.version = 11 : i64} {
  func.func @_mlp_kernel(%arg0: i32, %arg1: memref<8x784xf32, #tpu.memory_space<vmem>>, %arg2: memref<784x128xbf16, #tpu.memory_space<vmem>>, %arg3: memref<1x128xf32, #tpu.memory_space<vmem>>, %arg4: memref<128x128xbf16, #tpu.memory_space<vmem>>, %arg5: memref<1x128xf32, #tpu.memory_space<vmem>>, %arg6: memref<8x128xbf16, #tpu.memory_space<vmem>>) attributes {dimension_semantics = [#tpu.dimension_semantics<parallel>], iteration_bounds = array<i64: 1>, scalar_prefetch = 0 : i64, scratch_operands = 0 : i64, tpu.core_type = #tpu.core_type<tc>, window_params = [{transform_indices = @transform_0, window_bounds = array<i64: 8, 784>}, {pipeline_mode = #tpu.pipeline_mode<synchronous>, transform_indices = @transform_1, window_bounds = array<i64: 784, 128>}, {pipeline_mode = #tpu.pipeline_mode<synchronous>, transform_indices = @transform_2, window_bounds = array<i64: 1, 128>}, {pipeline_mode = #tpu.pipeline_mode<synchronous>, transform_indices = @transform_3, window_bounds = array<i64: 128, 128>}, {pipeline_mode = #tpu.pipeline_mode<synchronous>, transform_indices = @transform_4, window_bounds = array<i64: 1, 128>}, {transform_indices = @transform_5, window_bounds = array<i64: 8, 128>}]} {
    %c0 = arith.constant 0 : index
    %c0_0 = arith.constant 0 : index
    %0 = vector.load %arg1[%c0, %c0_0] : memref<8x784xf32, #tpu.memory_space<vmem>>, vector<8x784xf32>
    %1 = arith.truncf %0 : vector<8x784xf32> to vector<8x784xbf16>
    %c0_1 = arith.constant 0 : index
    %c0_2 = arith.constant 0 : index
    %2 = vector.load %arg2[%c0_1, %c0_2] : memref<784x128xbf16, #tpu.memory_space<vmem>>, vector<784x128xbf16>
    %cst = arith.constant dense<0.000000e+00> : vector<8x128xf32>
    %3 = tpu.matmul %1, %2, %cst {dimension_numbers = #tpu.dot_dimension_numbers<[1], [0], [0], [1], [0, 0, 1, 1], [], []>} : vector<8x784xbf16>, vector<784x128xbf16>, vector<8x128xf32> -> vector<8x128xf32>
    %c0_3 = arith.constant 0 : index
    %c0_4 = arith.constant 0 : index
    %4 = vector.load %arg3[%c0_3, %c0_4] : memref<1x128xf32, #tpu.memory_space<vmem>>, vector<1x128xf32>
    %5 = vector.broadcast %4 : vector<1x128xf32> to vector<8x128xf32>
    %6 = arith.addf %3, %5 : vector<8x128xf32>
    %cst_5 = arith.constant 0.000000e+00 : f32
    %7 = vector.broadcast %cst_5 : f32 to vector<8x128xf32>
    %8 = arith.maximumf %6, %7 : vector<8x128xf32>
    %9 = arith.truncf %8 : vector<8x128xf32> to vector<8x128xbf16>
    %c0_6 = arith.constant 0 : index
    %c0_7 = arith.constant 0 : index
    %10 = vector.load %arg4[%c0_6, %c0_7] : memref<128x128xbf16, #tpu.memory_space<vmem>>, vector<128x128xbf16>
    %cst_8 = arith.constant dense<0.000000e+00> : vector<8x128xf32>
    %11 = tpu.matmul %9, %10, %cst_8 {dimension_numbers = #tpu.dot_dimension_numbers<[1], [0], [0], [1], [0, 0, 1, 1], [], []>} : vector<8x128xbf16>, vector<128x128xbf16>, vector<8x128xf32> -> vector<8x128xf32>
    %c0_9 = arith.constant 0 : index
    %c0_10 = arith.constant 0 : index
    %12 = vector.load %arg5[%c0_9, %c0_10] : memref<1x128xf32, #tpu.memory_space<vmem>>, vector<1x128xf32>
    %13 = vector.broadcast %12 : vector<1x128xf32> to vector<8x128xf32>
    %14 = arith.addf %11, %13 : vector<8x128xf32>
    %15 = arith.truncf %14 : vector<8x128xf32> to vector<8x128xbf16>
    %c0_11 = arith.constant 0 : index
    %c0_12 = arith.constant 0 : index
    %16 = vector.load %arg6[%c0_11, %c0_12] : memref<8x128xbf16, #tpu.memory_space<vmem>>, vector<8x128xbf16>
    tpu.vector_store %arg6[%c0_11, %c0_12], %15 {strides = array<i32>} : memref<8x128xbf16, #tpu.memory_space<vmem>>, vector<8x128xbf16>,
    return
  }
  func.func @transform_0(%arg0: i32) -> (i32, i32) {
    %c0_i32 = arith.constant 0 : i32
    %c0_i32_0 = arith.constant 0 : i32
    return %arg0, %c0_i32 : i32, i32
  }
  func.func @transform_1(%arg0: i32) -> (i32, i32) {
    %c0_i32 = arith.constant 0 : i32
    %c0_i32_0 = arith.constant 0 : i32
    %c0_i32_1 = arith.constant 0 : i32
    return %c0_i32, %c0_i32_0 : i32, i32
  }
  func.func @transform_2(%arg0: i32) -> (i32, i32) {
    %c0_i32 = arith.constant 0 : i32
    %c0_i32_0 = arith.constant 0 : i32
    %c0_i32_1 = arith.constant 0 : i32
    return %c0_i32, %c0_i32_0 : i32, i32
  }
  func.func @transform_3(%arg0: i32) -> (i32, i32) {
    %c0_i32 = arith.constant 0 : i32
    %c0_i32_0 = arith.constant 0 : i32
    %c0_i32_1 = arith.constant 0 : i32
    return %c0_i32, %c0_i32_0 : i32, i32
  }
  func.func @transform_4(%arg0: i32) -> (i32, i32) {
    %c0_i32 = arith.constant 0 : i32
    %c0_i32_0 = arith.constant 0 : i32
    %c0_i32_1 = arith.constant 0 : i32
    return %c0_i32, %c0_i32_0 : i32, i32
  }
  func.func @transform_5(%arg0: i32) -> (i32, i32) {
    %c0_i32 = arith.constant 0 : i32
    %c0_i32_0 = arith.constant 0 : i32
    return %arg0, %c0_i32 : i32, i32
  }
}

</mosaic_0001>

<llo_original>
// kernel: babys_first_net.1
$region0: #{babys_first_net.1}
  #allocation0 [shape = 'u32[]', space=smem, size = 0x4, offset = 0x4, fixed_abs, tag = 'smem constant byte address 0x4 - core index']
  #allocation1 [shape = 'u32[144,128]{1,0:T(1,128)}', space=vmem, size = 0x12000, scoped, tag = 'internal scratch']
  %s0 = inlined_call_operand.vmem [shape: f32[8,784], index: 0, kind: input, shape index: {}]
  %s1 = inlined_call_operand.hbm [shape: bf16[784,128], index: 1, kind: input, shape index: {}]
  %s2 = inlined_call_operand.vmem [shape: f32[1,128], index: 2, kind: input, shape index: {}]
  %s3 = inlined_call_operand.vmem [shape: bf16[128,128], index: 3, kind: input, shape index: {}]
  %s4 = inlined_call_operand.vmem [shape: f32[1,128], index: 4, kind: input, shape index: {}]
  %s5 = inlined_call_operand.vmem [shape: bf16[8,128], index: 5, kind: output, shape index: {}]
  %s6 = sld [smem:[#allocation0]]
  $region34: #{babys_first_net.1} parent=0
    _
  %s8 = ssub.s32 1, %s6
  %s9 = scalar_select 0, %s8, %s6
  $region1: #{babys_first_net.1} parent=0
    #allocation2 [shape = 'u8[200704]{0}', space=vmem, size = 0x31000, scoped, tag = 'input window, operand 1, single buffered']
    #allocation3 [shape = 's32[1]{0}', space=sflag, size = 0x4, scoped, tag = 'scoped memory for babys_first_net.1']
    %10 = vsyncpa [#allocation3], 0
    // Predicated region
    $region2: #{babys_first_net.1} parent=1 // pred_check
      _
    $region3: #{babys_first_net.1} parent=1 // pred_check_branch
      %12 = sbr.rel (0) target = $region5
    $region4: #{babys_first_net.1} parent=1 // pred_region
      _
    $region5: #{babys_first_net.1} parent=1 // pred_fallthru
      _
    // Predicated region
    $region6: #{babys_first_net.1} parent=1 // pred_check
      _
    $region7: #{babys_first_net.1} parent=1 // pred_check_branch
      %14 = sbr.rel (0) target = $region9
    $region8: #{babys_first_net.1} parent=1 // pred_region
      %s16 = ssub.s32 6272, 6272
      %17 = vsyncadd [#allocation3], %s16
      %s18 = sshll.u32 [#allocation2], 4
      %s19 = int_to_ptr.vmem [resolvable:$true] %s18
      %24 = dma.hbm_to_vmem [thread:$0]  %s1, 6272, %s19, [#allocation3], 64, 64, 4
    $region9: #{babys_first_net.1} parent=1 // pred_fallthru
      _
    // Predicated region
    $region10: #{babys_first_net.1} parent=1 // pred_check
      _
    $region11: #{babys_first_net.1} parent=1 // pred_check_branch
      %26 = sbr.rel (0) target = $region13
    $region12: #{babys_first_net.1} parent=1 // pred_region
      _
    $region13: #{babys_first_net.1} parent=1 // pred_fallthru
      _
    // Predicated region
    $region14: #{babys_first_net.1} parent=1 // pred_check
      _
    $region15: #{babys_first_net.1} parent=1 // pred_check_branch
      %28 = sbr.rel (0) target = $region17
    $region16: #{babys_first_net.1} parent=1 // pred_region
      _
    $region17: #{babys_first_net.1} parent=1 // pred_fallthru
      _
    // Predicated region
    $region18: #{babys_first_net.1} parent=1 // pred_check
      _
    $region19: #{babys_first_net.1} parent=1 // pred_check_branch
      %30 = sbr.rel (0) target = $region21
    $region20: #{babys_first_net.1} parent=1 // pred_region
      _
    $region21: #{babys_first_net.1} parent=1 // pred_fallthru
      _
    // Predicated region
    $region22: #{babys_first_net.1} parent=1 // pred_check
      _
    $region23: #{babys_first_net.1} parent=1 // pred_check_branch
      %32 = sbr.rel (0) target = $region25
    $region24: #{babys_first_net.1} parent=1 // pred_region
      %33 = dma.done [#allocation3], 6272
    $region25: #{babys_first_net.1} parent=1 // pred_fallthru
      _
    %v35 = vld [vmem:[%s0] sm:$0xff]
    %v36 = vld [vmem:[%s0 + $0x8] sm:$0xff]
    %v37 = vld [vmem:[%s0 + $0x10] sm:$0xff]
    %v38 = vld [vmem:[%s0 + $0x18] sm:$0xff]
    %v39 = vld [vmem:[%s0 + $0x20] sm:$0xff]
    %v40 = vld [vmem:[%s0 + $0x28] sm:$0xff]
    %v41 = vld [vmem:[%s0 + $0x30] sm:$0xff]
    %v42 = vpack.c.bf16 %v35, %v35
    %v43 = vpack.c.bf16 %v36, %v36
    %v44 = vpack.c.bf16 %v37, %v37
    %v45 = vpack.c.bf16 %v38, %v38
    %v46 = vpack.c.bf16 %v39, %v39
    %v47 = vpack.c.bf16 %v40, %v40
    %v48 = vpack.c.bf16 %v41, %v41
    %v49 = vld [vmem:[#allocation2] sm:$0xf]
    %v50 = vld [vmem:[#allocation2 + $0x4] sm:$0xf]
    %v51 = vld [vmem:[#allocation2 + $0x8] sm:$0xf]
    %v52 = vld [vmem:[#allocation2 + $0xc] sm:$0xf]
    %v53 = vld [vmem:[#allocation2 + $0x10] sm:$0xf]
    %v54 = vld [vmem:[#allocation2 + $0x14] sm:$0xf]
    %v55 = vld [vmem:[#allocation2 + $0x18] sm:$0xf]
    %v56 = vld [vmem:[#allocation2 + $0x1c] sm:$0xf]
    %v57 = vld [vmem:[#allocation2 + $0x20] sm:$0xf]
    %v58 = vld [vmem:[#allocation2 + $0x24] sm:$0xf]
    %v59 = vld [vmem:[#allocation2 + $0x28] sm:$0xf]
    %v60 = vld [vmem:[#allocation2 + $0x2c] sm:$0xf]
    %v61 = vld [vmem:[#allocation2 + $0x30] sm:$0xf]
    %v62 = vld [vmem:[#allocation2 + $0x34] sm:$0xf]
    %v63 = vld [vmem:[#allocation2 + $0x38] sm:$0xf]
    %v64 = vld [vmem:[#allocation2 + $0x3c] sm:$0xf]
    %v65 = vld [vmem:[#allocation2 + $0x40] sm:$0xf]
    %v66 = vld [vmem:[#allocation2 + $0x44] sm:$0xf]
    %v67 = vld [vmem:[#allocation2 + $0x48] sm:$0xf]
    %v68 = vld [vmem:[#allocation2 + $0x4c] sm:$0xf]
    %v69 = vld [vmem:[#allocation2 + $0x50] sm:$0xf]
    %v70 = vld [vmem:[#allocation2 + $0x54] sm:$0xf]
    %v71 = vld [vmem:[#allocation2 + $0x58] sm:$0xf]
    %v72 = vld [vmem:[#allocation2 + $0x5c] sm:$0xf]
    %v73 = vld [vmem:[#allocation2 + $0x60] sm:$0xf]
    %v74 = vld [vmem:[#allocation2 + $0x64] sm:$0xf]
    %v75 = vld [vmem:[#allocation2 + $0x68] sm:$0xf]
    %v76 = vld [vmem:[#allocation2 + $0x6c] sm:$0xf]
    %v77 = vld [vmem:[#allocation2 + $0x70] sm:$0xf]
    %v78 = vld [vmem:[#allocation2 + $0x74] sm:$0xf]
    %v79 = vld [vmem:[#allocation2 + $0x78] sm:$0xf]
    %v80 = vld [vmem:[#allocation2 + $0x7c] sm:$0xf]
    %v81 = vld [vmem:[#allocation2 + $0x80] sm:$0xf]
    %v82 = vld [vmem:[#allocation2 + $0x84] sm:$0xf]
    %v83 = vld [vmem:[#allocation2 + $0x88] sm:$0xf]
    %v84 = vld [vmem:[#allocation2 + $0x8c] sm:$0xf]
    %v85 = vld [vmem:[#allocation2 + $0x90] sm:$0xf]
    %v86 = vld [vmem:[#allocation2 + $0x94] sm:$0xf]
    %v87 = vld [vmem:[#allocation2 + $0x98] sm:$0xf]
    %v88 = vld [vmem:[#allocation2 + $0x9c] sm:$0xf]
    %v89 = vld [vmem:[#allocation2 + $0xa0] sm:$0xf]
    %v90 = vld [vmem:[#allocation2 + $0xa4] sm:$0xf]
    %v91 = vld [vmem:[#allocation2 + $0xa8] sm:$0xf]
    %v92 = vld [vmem:[#allocation2 + $0xac] sm:$0xf]
    %v93 = vld [vmem:[#allocation2 + $0xb0] sm:$0xf]
    %v94 = vld [vmem:[#allocation2 + $0xb4] sm:$0xf]
    %v95 = vld [vmem:[#allocation2 + $0xb8] sm:$0xf]
    %v96 = vld [vmem:[#allocation2 + $0xbc] sm:$0xf]
    %v97 = vld [vmem:[#allocation2 + $0xc0] sm:$0xf]
    %v98 = vld [vmem:[#allocation2 + $0xc4] sm:$0xf]
    %v99 = vld [vmem:[#allocation2 + $0xc8] sm:$0xf]
    %v100 = vld [vmem:[#allocation2 + $0xcc] sm:$0xf]
    %v101 = vld [vmem:[#allocation2 + $0xd0] sm:$0xf]
    %v102 = vld [vmem:[#allocation2 + $0xd4] sm:$0xf]
    %v103 = vld [vmem:[#allocation2 + $0xd8] sm:$0xf]
    %v104 = vld [vmem:[#allocation2 + $0xdc] sm:$0xf]
    %v105 = vld [vmem:[#allocation2 + $0xe0] sm:$0xf]
    %v106 = vld [vmem:[#allocation2 + $0xe4] sm:$0xf]
    %v107 = vld [vmem:[#allocation2 + $0xe8] sm:$0xf]
    %v108 = vld [vmem:[#allocation2 + $0xec] sm:$0xf]
    %v109 = vld [vmem:[#allocation2 + $0xf0] sm:$0xf]
    %v110 = vld [vmem:[#allocation2 + $0xf4] sm:$0xf]
    %v111 = vld [vmem:[#allocation2 + $0xf8] sm:$0xf]
    %v112 = vld [vmem:[#allocation2 + $0xfc] sm:$0xf]
    %v113 = vld [vmem:[#allocation2 + $0x100] sm:$0xf]
    %v114 = vld [vmem:[#allocation2 + $0x104] sm:$0xf]
    %v115 = vld [vmem:[#allocation2 + $0x108] sm:$0xf]
    %v116 = vld [vmem:[#allocation2 + $0x10c] sm:$0xf]
    %v117 = vld [vmem:[#allocation2 + $0x110] sm:$0xf]
    %v118 = vld [vmem:[#allocation2 + $0x114] sm:$0xf]
    %v119 = vld [vmem:[#allocation2 + $0x118] sm:$0xf]
    %v120 = vld [vmem:[#allocation2 + $0x11c] sm:$0xf]
    %v121 = vld [vmem:[#allocation2 + $0x120] sm:$0xf]
    %v122 = vld [vmem:[#allocation2 + $0x124] sm:$0xf]
    %v123 = vld [vmem:[#allocation2 + $0x128] sm:$0xf]
    %v124 = vld [vmem:[#allocation2 + $0x12c] sm:$0xf]
    %v125 = vld [vmem:[#allocation2 + $0x130] sm:$0xf]
    %v126 = vld [vmem:[#allocation2 + $0x134] sm:$0xf]
    %v127 = vld [vmem:[#allocation2 + $0x138] sm:$0xf]
    %v128 = vld [vmem:[#allocation2 + $0x13c] sm:$0xf]
    %v129 = vld [vmem:[#allocation2 + $0x140] sm:$0xf]
    %v130 = vld [vmem:[#allocation2 + $0x144] sm:$0xf]
    %v131 = vld [vmem:[#allocation2 + $0x148] sm:$0xf]
    %v132 = vld [vmem:[#allocation2 + $0x14c] sm:$0xf]
    %v133 = vld [vmem:[#allocation2 + $0x150] sm:$0xf]
    %v134 = vld [vmem:[#allocation2 + $0x154] sm:$0xf]
    %v135 = vld [vmem:[#allocation2 + $0x158] sm:$0xf]
    %v136 = vld [vmem:[#allocation2 + $0x15c] sm:$0xf]
    %v137 = vld [vmem:[#allocation2 + $0x160] sm:$0xf]
    %v138 = vld [vmem:[#allocation2 + $0x164] sm:$0xf]
    %v139 = vld [vmem:[#allocation2 + $0x168] sm:$0xf]
    %v140 = vld [vmem:[#allocation2 + $0x16c] sm:$0xf]
    %v141 = vld [vmem:[#allocation2 + $0x170] sm:$0xf]
    %v142 = vld [vmem:[#allocation2 + $0x174] sm:$0xf]
    %v143 = vld [vmem:[#allocation2 + $0x178] sm:$0xf]
    %v144 = vld [vmem:[#allocation2 + $0x17c] sm:$0xf]
    %v145 = vld [vmem:[#allocation2 + $0x180] sm:$0xf]
    %v146 = vld [vmem:[#allocation2 + $0x184] sm:$0xf]
    %v147 = vld [vmem:[%s2] sm:$0x1]
    %v149 = vlaneseq
    %v150 = vshrl.u32 %v149, 7
    %v151 = vsub.s32 0, %v150
    %v152 = vrot.slane %v147, %v151
    %v252 = vunpack.c.l.b16 %v49
    %v253 = vunpack.c.l.b16 %v50
    %v254 = vunpack.c.l.b16 %v51
    %v255 = vunpack.c.l.b16 %v52
    %v256 = vunpack.c.l.b16 %v53
    %v257 = vunpack.c.l.b16 %v54
    %v258 = vunpack.c.l.b16 %v55
    %v259 = vunpack.c.l.b16 %v56
    %v260 = vunpack.c.l.b16 %v57
    %v261 = vunpack.c.l.b16 %v58
    %v262 = vunpack.c.l.b16 %v59
    %v263 = vunpack.c.l.b16 %v60
    %v264 = vunpack.c.l.b16 %v61
    %v265 = vunpack.c.l.b16 %v62
    %v266 = vunpack.c.l.b16 %v63
    %v267 = vunpack.c.l.b16 %v64
    %v268 = vunpack.c.l.b16 %v65
    %v269 = vunpack.c.l.b16 %v66
    %v270 = vunpack.c.l.b16 %v67
    %v271 = vunpack.c.l.b16 %v68
    %v272 = vunpack.c.l.b16 %v69
    %v273 = vunpack.c.l.b16 %v70
    %v274 = vunpack.c.l.b16 %v71
    %v275 = vunpack.c.l.b16 %v72
    %v276 = vunpack.c.l.b16 %v73
    %v277 = vunpack.c.l.b16 %v74
    %v278 = vunpack.c.l.b16 %v75
    %v279 = vunpack.c.l.b16 %v76
    %v280 = vunpack.c.l.b16 %v77
    %v281 = vunpack.c.l.b16 %v78
    %v282 = vunpack.c.l.b16 %v79
    %v283 = vunpack.c.l.b16 %v80
    %v284 = vunpack.c.l.b16 %v81
    %v285 = vunpack.c.l.b16 %v82
    %v286 = vunpack.c.l.b16 %v83
    %v287 = vunpack.c.l.b16 %v84
    %v288 = vunpack.c.l.b16 %v85
    %v289 = vunpack.c.l.b16 %v86
    %v290 = vunpack.c.l.b16 %v87
    %v291 = vunpack.c.l.b16 %v88
    %v292 = vunpack.c.l.b16 %v89
    %v293 = vunpack.c.l.b16 %v90
    %v294 = vunpack.c.l.b16 %v91
    %v295 = vunpack.c.l.b16 %v92
    %v296 = vunpack.c.l.b16 %v93
    %v297 = vunpack.c.l.b16 %v94
    %v298 = vunpack.c.l.b16 %v95
    %v299 = vunpack.c.l.b16 %v96
    %v300 = vunpack.c.l.b16 %v97
    %v301 = vunpack.c.l.b16 %v98
    %v302 = vunpack.c.l.b16 %v99
    %v303 = vunpack.c.l.b16 %v100
    %v304 = vunpack.c.l.b16 %v101
    %v305 = vunpack.c.l.b16 %v102
    %v306 = vunpack.c.l.b16 %v103
    %v307 = vunpack.c.l.b16 %v104
    %v308 = vunpack.c.l.b16 %v105
    %v309 = vunpack.c.l.b16 %v106
    %v310 = vunpack.c.l.b16 %v107
    %v311 = vunpack.c.l.b16 %v108
    %v312 = vunpack.c.l.b16 %v109
    %v313 = vunpack.c.l.b16 %v110
    %v314 = vunpack.c.l.b16 %v111
    %v315 = vunpack.c.l.b16 %v112
    %v316 = vunpack.c.l.b16 %v113
    %v317 = vunpack.c.l.b16 %v114
    %v318 = vunpack.c.l.b16 %v115
    %v319 = vunpack.c.l.b16 %v116
    %v320 = vunpack.c.l.b16 %v117
    %v321 = vunpack.c.l.b16 %v118
    %v322 = vunpack.c.l.b16 %v119
    %v323 = vunpack.c.l.b16 %v120
    %v324 = vunpack.c.l.b16 %v121
    %v325 = vunpack.c.l.b16 %v122
    %v326 = vunpack.c.l.b16 %v123
    %v327 = vunpack.c.l.b16 %v124
    %v328 = vunpack.c.l.b16 %v125
    %v329 = vunpack.c.l.b16 %v126
    %v330 = vunpack.c.l.b16 %v127
    %v331 = vunpack.c.l.b16 %v128
    %v332 = vunpack.c.l.b16 %v129
    %v333 = vunpack.c.l.b16 %v130
    %v334 = vunpack.c.l.b16 %v131
    %v335 = vunpack.c.l.b16 %v132
    %v336 = vunpack.c.l.b16 %v133
    %v337 = vunpack.c.l.b16 %v134
    %v338 = vunpack.c.l.b16 %v135
    %v339 = vunpack.c.l.b16 %v136
    %v340 = vunpack.c.l.b16 %v137
    %v341 = vunpack.c.l.b16 %v138
    %v342 = vunpack.c.l.b16 %v139
    %v343 = vunpack.c.l.b16 %v140
    %v344 = vunpack.c.l.b16 %v141
    %v345 = vunpack.c.l.b16 %v142
    %v346 = vunpack.c.l.b16 %v143
    %v347 = vunpack.c.l.b16 %v144
    %v348 = vunpack.c.l.b16 %v145
    %v349 = vunpack.c.l.b16 %v146
    %v350 = vpack.c.b16 %v253, %v252
    %v351 = vpack.c.b16 %v255, %v254
    %v352 = vpack.c.b16 %v257, %v256
    %v353 = vpack.c.b16 %v259, %v258
    %v354 = vpack.c.b16 %v261, %v260
    %v355 = vpack.c.b16 %v263, %v262
    %v356 = vpack.c.b16 %v265, %v264
    %v357 = vpack.c.b16 %v267, %v266
    %v358 = vpack.c.b16 %v269, %v268
    %v359 = vpack.c.b16 %v271, %v270
    %v360 = vpack.c.b16 %v273, %v272
    %v361 = vpack.c.b16 %v275, %v274
    %v362 = vpack.c.b16 %v277, %v276
    %v363 = vpack.c.b16 %v279, %v278
    %v364 = vpack.c.b16 %v281, %v280
    %v365 = vpack.c.b16 %v283, %v282
    %v366 = vpack.c.b16 %v285, %v284
    %v367 = vpack.c.b16 %v287, %v286
    %v368 = vpack.c.b16 %v289, %v288
    %v369 = vpack.c.b16 %v291, %v290
    %v370 = vpack.c.b16 %v293, %v292
    %v371 = vpack.c.b16 %v295, %v294
    %v372 = vpack.c.b16 %v297, %v296
    %v373 = vpack.c.b16 %v299, %v298
    %v374 = vpack.c.b16 %v301, %v300
    %v375 = vpack.c.b16 %v303, %v302
    %v376 = vpack.c.b16 %v305, %v304
    %v377 = vpack.c.b16 %v307, %v306
    %v378 = vpack.c.b16 %v309, %v308
    %v379 = vpack.c.b16 %v311, %v310
    %v380 = vpack.c.b16 %v313, %v312
    %v381 = vpack.c.b16 %v315, %v314
    %v382 = vpack.c.b16 %v317, %v316
    %v383 = vpack.c.b16 %v319, %v318
    %v384 = vpack.c.b16 %v321, %v320
    %v385 = vpack.c.b16 %v323, %v322
    %v386 = vpack.c.b16 %v325, %v324
    %v387 = vpack.c.b16 %v327, %v326
    %v388 = vpack.c.b16 %v329, %v328
    %v389 = vpack.c.b16 %v331, %v330
    %v390 = vpack.c.b16 %v333, %v332
    %v391 = vpack.c.b16 %v335, %v334
    %v392 = vpack.c.b16 %v337, %v336
    %v393 = vpack.c.b16 %v339, %v338
    %v394 = vpack.c.b16 %v341, %v340
    %v395 = vpack.c.b16 %v343, %v342
    %v396 = vpack.c.b16 %v345, %v344
    %v397 = vpack.c.b16 %v347, %v346
    %v398 = vpack.c.b16 %v349, %v348
    %vm448 = vcmask 130048
    %v450 = vsel %vm448, %v48, 0
    %452 = vmatprep.subr.bf16.mxu0 0
    %453 = vmatpush1.bf16.msra.mxu0 %v357
    %454 = vmatprep.subr.bf16.mxu0 0
    %455 = vmatpush1.bf16.msra.mxu0 %v356
    %456 = vmatprep.subr.bf16.mxu0 0
    %457 = vmatpush1.bf16.msra.mxu0 %v355
    %458 = vmatprep.subr.bf16.mxu0 0
    %459 = vmatpush1.bf16.msra.mxu0 %v354
    %460 = vmatprep.subr.bf16.mxu0 0
    %461 = vmatpush1.bf16.msra.mxu0 %v353
    %462 = vmatprep.subr.bf16.mxu0 0
    %463 = vmatpush1.bf16.msra.mxu0 %v352
    %464 = vmatprep.subr.bf16.mxu0 0
    %465 = vmatpush1.bf16.msra.mxu0 %v351
    %466 = vmatprep.subr.bf16.mxu0 0
    %467 = vmatpush1.bf16.msra.mxu0 %v350
    %468 = vmatprep.subr.bf16.mxu0 0
    %469 = vmatpush2.bf16.msra.mxu0 %v365
    %470 = vmatprep.subr.bf16.mxu0 0
    %471 = vmatpush2.bf16.msra.mxu0 %v364
    %472 = vmatprep.subr.bf16.mxu0 0
    %473 = vmatpush2.bf16.msra.mxu0 %v363
    %474 = vmatprep.subr.bf16.mxu0 0
    %475 = vmatpush2.bf16.msra.mxu0 %v362
    %476 = vmatprep.subr.bf16.mxu0 0
    %477 = vmatpush2.bf16.msra.mxu0 %v361
    %478 = vmatprep.subr.bf16.mxu0 0
    %479 = vmatpush2.bf16.msra.mxu0 %v360
    %480 = vmatprep.subr.bf16.mxu0 0
    %481 = vmatpush2.bf16.msra.mxu0 %v359
    %482 = vmatprep.subr.bf16.mxu0 0
    %483 = vmatpush2.bf16.msra.mxu0 %v358
    %484 = vmatprep.mubr.bf16.mxu0 %v43
    %485 = vmatmul.mubr.bf16.gmra.mxu0 %v42
    %v486 = vpop.f32.mrf.mxu0
    %v487 = vadd.f32 %v152, %v486
    %v488 = vpop.f32.mrf.mxu0
    %v489 = vpop.f32.mrf.mxu0
    %v490 = vpop.f32.mrf.mxu0
    %491 = vdwg.mxu0
    %492 = vmatprep.subr.bf16.mxu0 0
    %493 = vmatpush1.bf16.msra.mxu0 %v373
    %494 = vmatprep.subr.bf16.mxu0 0
    %495 = vmatpush1.bf16.msra.mxu0 %v372
    %496 = vmatprep.subr.bf16.mxu0 0
    %497 = vmatpush1.bf16.msra.mxu0 %v371
    %498 = vmatprep.subr.bf16.mxu0 0
    %499 = vmatpush1.bf16.msra.mxu0 %v370
    %500 = vmatprep.subr.bf16.mxu0 0
    %501 = vmatpush1.bf16.msra.mxu0 %v369
    %502 = vmatprep.subr.bf16.mxu0 0
    %503 = vmatpush1.bf16.msra.mxu0 %v368
    %504 = vmatprep.subr.bf16.mxu0 0
    %505 = vmatpush1.bf16.msra.mxu0 %v367
    %506 = vmatprep.subr.bf16.mxu0 0
    %507 = vmatpush1.bf16.msra.mxu0 %v366
    %508 = vmatprep.subr.bf16.mxu0 0
    %509 = vmatpush2.bf16.msra.mxu0 %v381
    %510 = vmatprep.subr.bf16.mxu0 0
    %511 = vmatpush2.bf16.msra.mxu0 %v380
    %512 = vmatprep.subr.bf16.mxu0 0
    %513 = vmatpush2.bf16.msra.mxu0 %v379
    %514 = vmatprep.subr.bf16.mxu0 0
    %515 = vmatpush2.bf16.msra.mxu0 %v378
    %516 = vmatprep.subr.bf16.mxu0 0
    %517 = vmatpush2.bf16.msra.mxu0 %v377
    %518 = vmatprep.subr.bf16.mxu0 0
    %519 = vmatpush2.bf16.msra.mxu0 %v376
    %520 = vmatprep.subr.bf16.mxu0 0
    %521 = vmatpush2.bf16.msra.mxu0 %v375
    %522 = vmatprep.subr.bf16.mxu0 0
    %523 = vmatpush2.bf16.msra.mxu0 %v374
    %524 = vmatprep.mubr.bf16.mxu0 %v45
    %525 = vmatmul.mubr.bf16.gmra.mxu0 %v44
    %v526 = vpop.f32.mrf.mxu0
    %v527 = vadd.f32 %v487, %v526
    %v528 = vpop.f32.mrf.mxu0
    %v529 = vpop.f32.mrf.mxu0
    %v530 = vpop.f32.mrf.mxu0
    %531 = vdwg.mxu0
    %532 = vmatprep.subr.bf16.mxu0 0
    %533 = vmatpush1.bf16.msra.mxu0 %v389
    %534 = vmatprep.subr.bf16.mxu0 0
    %535 = vmatpush1.bf16.msra.mxu0 %v388
    %536 = vmatprep.subr.bf16.mxu0 0
    %537 = vmatpush1.bf16.msra.mxu0 %v387
    %538 = vmatprep.subr.bf16.mxu0 0
    %539 = vmatpush1.bf16.msra.mxu0 %v386
    %540 = vmatprep.subr.bf16.mxu0 0
    %541 = vmatpush1.bf16.msra.mxu0 %v385
    %542 = vmatprep.subr.bf16.mxu0 0
    %543 = vmatpush1.bf16.msra.mxu0 %v384
    %544 = vmatprep.subr.bf16.mxu0 0
    %545 = vmatpush1.bf16.msra.mxu0 %v383
    %546 = vmatprep.subr.bf16.mxu0 0
    %547 = vmatpush1.bf16.msra.mxu0 %v382
    %548 = vmatprep.subr.bf16.mxu0 0
    %549 = vmatpush2.bf16.msra.mxu0 %v397
    %550 = vmatprep.subr.bf16.mxu0 0
    %551 = vmatpush2.bf16.msra.mxu0 %v396
    %552 = vmatprep.subr.bf16.mxu0 0
    %553 = vmatpush2.bf16.msra.mxu0 %v395
    %554 = vmatprep.subr.bf16.mxu0 0
    %555 = vmatpush2.bf16.msra.mxu0 %v394
    %556 = vmatprep.subr.bf16.mxu0 0
    %557 = vmatpush2.bf16.msra.mxu0 %v393
    %558 = vmatprep.subr.bf16.mxu0 0
    %559 = vmatpush2.bf16.msra.mxu0 %v392
    %560 = vmatprep.subr.bf16.mxu0 0
    %561 = vmatpush2.bf16.msra.mxu0 %v391
    %562 = vmatprep.subr.bf16.mxu0 0
    %563 = vmatpush2.bf16.msra.mxu0 %v390
    %564 = vmatprep.mubr.bf16.mxu0 %v47
    %565 = vmatmul.mubr.bf16.gmra.mxu0 %v46
    %v566 = vpop.f32.mrf.mxu0
    %v567 = vadd.f32 %v527, %v566
    %v568 = vpop.f32.mrf.mxu0
    %v569 = vpop.f32.mrf.mxu0
    %v570 = vpop.f32.mrf.mxu0
    %571 = vdwg.mxu0
    %572 = vmatprep.subr.bf16.mxu0 0
    %573 = vmatpush1.bf16.msra.mxu0 0
    %574 = vmatprep.subr.bf16.mxu0 0
    %575 = vmatpush1.bf16.msra.mxu0 0
    %576 = vmatprep.subr.bf16.mxu0 0
    %577 = vmatpush1.bf16.msra.mxu0 0
    %578 = vmatprep.subr.bf16.mxu0 0
    %579 = vmatpush1.bf16.msra.mxu0 0
    %580 = vmatprep.subr.bf16.mxu0 0
    %581 = vmatpush1.bf16.msra.mxu0 0
    %582 = vmatprep.subr.bf16.mxu0 0
    %583 = vmatpush1.bf16.msra.mxu0 0
    %584 = vmatprep.subr.bf16.mxu0 0
    %585 = vmatpush1.bf16.msra.mxu0 0
    %586 = vmatprep.subr.bf16.mxu0 0
    %587 = vmatpush1.bf16.msra.mxu0 %v398
    %588 = vmatprep.subr.bf16.mxu0 0
    %589 = vmatpush2.bf16.msra.mxu0 0
    %590 = vmatprep.subr.bf16.mxu0 0
    %591 = vmatpush2.bf16.msra.mxu0 0
    %592 = vmatprep.subr.bf16.mxu0 0
    %593 = vmatpush2.bf16.msra.mxu0 0
    %594 = vmatprep.subr.bf16.mxu0 0
    %595 = vmatpush2.bf16.msra.mxu0 0
    %596 = vmatprep.subr.bf16.mxu0 0
    %597 = vmatpush2.bf16.msra.mxu0 0
    %598 = vmatprep.subr.bf16.mxu0 0
    %599 = vmatpush2.bf16.msra.mxu0 0
    %600 = vmatprep.subr.bf16.mxu0 0
    %601 = vmatpush2.bf16.msra.mxu0 0
    %602 = vmatprep.subr.bf16.mxu0 0
    %603 = vmatpush2.bf16.msra.mxu0 0
    %604 = vmatprep.mubr.bf16.mxu0 0
    %605 = vmatmul.mubr.bf16.gmra.mxu0 %v450
    %v606 = vpop.f32.mrf.mxu0
    %v607 = vadd.f32 %v567, %v606
    %v608 = vpop.f32.mrf.mxu0
    %v609 = vpop.f32.mrf.mxu0
    %v610 = vpop.f32.mrf.mxu0
    %611 = vdwg.mxu0
    %v612 = vmax.f32 %v607, 0.0
    %v613 = vpack.c.bf16 %v612, %v612
    %v614 = vld [vmem:[%s3] sm:$0xf]
    %v615 = vld [vmem:[%s3 + $0x4] sm:$0xf]
    %v616 = vld [vmem:[%s3 + $0x8] sm:$0xf]
    %v617 = vld [vmem:[%s3 + $0xc] sm:$0xf]
    %v618 = vld [vmem:[%s3 + $0x10] sm:$0xf]
    %v619 = vld [vmem:[%s3 + $0x14] sm:$0xf]
    %v620 = vld [vmem:[%s3 + $0x18] sm:$0xf]
    %v621 = vld [vmem:[%s3 + $0x1c] sm:$0xf]
    %v622 = vld [vmem:[%s3 + $0x20] sm:$0xf]
    %v623 = vld [vmem:[%s3 + $0x24] sm:$0xf]
    %v624 = vld [vmem:[%s3 + $0x28] sm:$0xf]
    %v625 = vld [vmem:[%s3 + $0x2c] sm:$0xf]
    %v626 = vld [vmem:[%s3 + $0x30] sm:$0xf]
    %v627 = vld [vmem:[%s3 + $0x34] sm:$0xf]
    %v628 = vld [vmem:[%s3 + $0x38] sm:$0xf]
    %v629 = vld [vmem:[%s3 + $0x3c] sm:$0xf]
    %v630 = vld [vmem:[%s4] sm:$0x1]
    %v632 = vlaneseq
    %v633 = vshrl.u32 %v632, 7
    %v634 = vsub.s32 0, %v633
    %v635 = vrot.slane %v630, %v634
    %v653 = vunpack.c.l.b16 %v614
    %v654 = vunpack.c.l.b16 %v615
    %v655 = vunpack.c.l.b16 %v616
    %v656 = vunpack.c.l.b16 %v617
    %v657 = vunpack.c.l.b16 %v618
    %v658 = vunpack.c.l.b16 %v619
    %v659 = vunpack.c.l.b16 %v620
    %v660 = vunpack.c.l.b16 %v621
    %v661 = vunpack.c.l.b16 %v622
    %v662 = vunpack.c.l.b16 %v623
    %v663 = vunpack.c.l.b16 %v624
    %v664 = vunpack.c.l.b16 %v625
    %v665 = vunpack.c.l.b16 %v626
    %v666 = vunpack.c.l.b16 %v627
    %v667 = vunpack.c.l.b16 %v628
    %v668 = vunpack.c.l.b16 %v629
    %v669 = vpack.c.b16 %v654, %v653
    %v670 = vpack.c.b16 %v656, %v655
    %v671 = vpack.c.b16 %v658, %v657
    %v672 = vpack.c.b16 %v660, %v659
    %v673 = vpack.c.b16 %v662, %v661
    %v674 = vpack.c.b16 %v664, %v663
    %v675 = vpack.c.b16 %v666, %v665
    %v676 = vpack.c.b16 %v668, %v667
    %685 = vmatprep.subr.bf16.mxu0 0
    %686 = vmatpush1.bf16.msra.mxu0 %v676
    %687 = vmatprep.subr.bf16.mxu0 0
    %688 = vmatpush1.bf16.msra.mxu0 %v675
    %689 = vmatprep.subr.bf16.mxu0 0
    %690 = vmatpush1.bf16.msra.mxu0 %v674
    %691 = vmatprep.subr.bf16.mxu0 0
    %692 = vmatpush1.bf16.msra.mxu0 %v673
    %693 = vmatprep.subr.bf16.mxu0 0
    %694 = vmatpush1.bf16.msra.mxu0 %v672
    %695 = vmatprep.subr.bf16.mxu0 0
    %696 = vmatpush1.bf16.msra.mxu0 %v671
    %697 = vmatprep.subr.bf16.mxu0 0
    %698 = vmatpush1.bf16.msra.mxu0 %v670
    %699 = vmatprep.subr.bf16.mxu0 0
    %700 = vmatpush1.bf16.msra.mxu0 %v669
    %701 = vmatprep.subr.bf16.mxu0 0
    %702 = vmatpush2.bf16.msra.mxu0 0
    %703 = vmatprep.subr.bf16.mxu0 0
    %704 = vmatpush2.bf16.msra.mxu0 0
    %705 = vmatprep.subr.bf16.mxu0 0
    %706 = vmatpush2.bf16.msra.mxu0 0
    %707 = vmatprep.subr.bf16.mxu0 0
    %708 = vmatpush2.bf16.msra.mxu0 0
    %709 = vmatprep.subr.bf16.mxu0 0
    %710 = vmatpush2.bf16.msra.mxu0 0
    %711 = vmatprep.subr.bf16.mxu0 0
    %712 = vmatpush2.bf16.msra.mxu0 0
    %713 = vmatprep.subr.bf16.mxu0 0
    %714 = vmatpush2.bf16.msra.mxu0 0
    %715 = vmatprep.subr.bf16.mxu0 0
    %716 = vmatpush2.bf16.msra.mxu0 0
    %717 = vmatprep.mubr.bf16.mxu0 0
    %718 = vmatmul.mubr.bf16.gmra.mxu0 %v613
    %v719 = vpop.f32.mrf.mxu0
    %v720 = vadd.f32 %v635, %v719
    %v721 = vpop.f32.mrf.mxu0
    %v722 = vpop.f32.mrf.mxu0
    %v723 = vpop.f32.mrf.mxu0
    %724 = vdwg.mxu0
    %v725 = vpack.c.bf16 %v720, %v720
    %726 = vst [vmem:[%s5] sm:$0xf] %v725
    // Predicated region
    $region26: #{babys_first_net.1} parent=1 // pred_check
      _
    $region27: #{babys_first_net.1} parent=1 // pred_check_branch
      %728 = sbr.rel (0) target = $region29
    $region28: #{babys_first_net.1} parent=1 // pred_region
      _
    $region29: #{babys_first_net.1} parent=1 // pred_fallthru
      _
    // Predicated region
    $region30: #{babys_first_net.1} parent=1 // pred_check
      _
    $region31: #{babys_first_net.1} parent=1 // pred_check_branch
      %730 = sbr.rel (0) target = $region33
    $region32: #{babys_first_net.1} parent=1 // pred_region
      _
    $region33: #{babys_first_net.1} parent=1 // pred_fallthru
      _
    %731 = vsyncpa [#allocation3], 1

</llo_original>
